<compile_context>
chip_gen: v7x
topology: tpu7x:2x2x1
jax: 0.10.0
libtpu: 0.0.40
codegen_flags: <defaults>
</compile_context>

<pallas_src>
import functools

import jax
import jax.numpy as jnp
from jax.experimental import pallas as pl
from jax.experimental.pallas import tpu as pltpu


def _round_up(x, m):
    return ((x + m - 1) // m) * m


def _odefunc_kernel(y_ref, w1_ref, b1_ref, w2_ref, b2_ref, out_ref, *, negate):
    # Linear -> Tanh -> Linear.
    # MXU matmuls accumulate in f32; bias add + tanh stay in f32 (free under
    # the HBM stream, and v5e's VPU/EUP have no bf16 path); downcast at store.
    y = y_ref[...].astype(w1_ref.dtype)
    h = jnp.dot(y, w1_ref[...], preferred_element_type=jnp.float32)
    h = jnp.tanh(h + b1_ref[...].astype(jnp.float32))
    o = jnp.dot(h.astype(w2_ref.dtype), w2_ref[...],
                preferred_element_type=jnp.float32)
    o = o + b2_ref[...].astype(jnp.float32)
    if negate:  # static: reverse() traces its own kernel, no runtime scale.
        o = -o
    out_ref[...] = o.astype(out_ref.dtype)


def _odefunc_pallas(y, params, *, negate):
    w1, b1, w2, b2 = params["w1"], params["b1"], params["w2"], params["b2"]
    batch, n_input = y.shape
    n_hidden = w1.shape[1]
    n_output = w2.shape[1]

    # Row alignment: 8 sublanes for f32, 16 for packed bf16 activations.
    row_align = 16 if y.dtype == jnp.bfloat16 else 8
    # Aim for >= 2 grid steps (v7x megacore sharding) with tiles up to 2048
    # rows to amortize the ~0.35us per-grid-step overhead; per-tile VMEM is a
    # few tens of KiB now that features are narrow.
    tile_b = max(row_align, min(2048, _round_up(-(-batch // 2), row_align)))
    batch_p = _round_up(batch, tile_b)

    # Only the (tiny, feature-narrow) batch remainder is padded; no feature
    # padding in HBM.
    y_p = y if batch_p == batch else jnp.pad(y, ((0, batch_p - batch), (0, 0)))

    act_bytes = jnp.dtype(y.dtype).itemsize
    w_bytes = jnp.dtype(w1.dtype).itemsize
    cost = pl.CostEstimate(
        flops=2 * batch_p * (n_input * n_hidden + n_hidden * n_output),
        transcendentals=batch_p * n_hidden,
        bytes_accessed=(
            batch_p * (n_input + n_output) * act_bytes
            + (w1.size + b1.size + w2.size + b2.size) * w_bytes
        ),
    )

    out = pl.pallas_call(
        functools.partial(_odefunc_kernel, negate=negate),
        out_shape=jax.ShapeDtypeStruct((batch_p, n_output), y.dtype),
        grid=(batch_p // tile_b,),
        in_specs=[
            # Activations: tiled along batch, natural (narrow) feature width.
            pl.BlockSpec((tile_b, n_input), lambda i: (i, 0)),
            # Weights/biases: constant index_map -> fetched once, VMEM-resident
            # across all batch tiles.
            pl.BlockSpec((n_input, n_hidden), lambda i: (0, 0)),
            pl.BlockSpec((1, n_hidden), lambda i: (0, 0)),
            pl.BlockSpec((n_hidden, n_output), lambda i: (0, 0)),
            pl.BlockSpec((1, n_output), lambda i: (0, 0)),
        ],
        out_specs=pl.BlockSpec((tile_b, n_output), lambda i: (i, 0)),
        compiler_params=pltpu.CompilerParams(
            # Parallel batch axis: megacore sharding on v7x, harmless on
            # v5e/v6e (single TC).
            dimension_semantics=("parallel",),
            vmem_limit_bytes=32 * 1024 * 1024,
        ),
        cost_estimate=cost,
    )(y_p, w1, b1, w2, b2)

    return out if batch_p == batch else out[:batch]


def odefunc_forward(t, y, params):
    """Equivalent of ODEFunc.forward(t, y) -> net(y). `t` unused (as in PyTorch)."""
    return _odefunc_pallas(y, params, negate=False)


def odefunc_reverse(t, y, params):
    """Equivalent of ODEFunc.reverse(t, y) -> -net(y). Negation fused in-kernel."""
    return _odefunc_pallas(y, params, negate=True)


def init_params(key, n_input, n_hidden, n_output, dtype=jnp.float32):
    """Matches PyTorch init (weights ~ N(0, 0.1), biases = 0), stored in the
    transposed (in, out) layout at natural (un-padded) widths.  Use
    dtype=jnp.bfloat16 to halve weight HBM traffic on the streaming path."""
    k1, k2 = jax.random.split(key)
    w1 = (0.1 * jax.random.normal(k1, (n_input, n_hidden))).astype(dtype)
    w2 = (0.1 * jax.random.normal(k2, (n_hidden, n_output))).astype(dtype)
    b1 = jnp.zeros((1, n_hidden), dtype)
    b2 = jnp.zeros((1, n_output), dtype)
    return dict(w1=w1, b1=b1, w2=w2, b2=b2)


if __name__ == "__main__":
    key = jax.random.PRNGKey(0)
    kp, ky = jax.random.split(key)

    batch, n_input, n_hidden, n_output = 8, 4, 32, 4
    params = init_params(kp, n_input, n_hidden, n_output, dtype=jnp.float32)
    y = jax.random.normal(ky, (batch, n_input), dtype=jnp.float32)
    t = jnp.float32(0.0)  # unused by forward, kept for API parity

    out = jax.block_until_ready(odefunc_forward(t, y, params))

    # Plain-JAX reference.
    ref = jnp.tanh(y @ params["w1"] + params["b1"]) @ params["w2"] + params["b2"]

    assert out.shape == (batch, n_output)
    assert jnp.allclose(out, ref, atol=1e-5, rtol=1e-5)

    rev = jax.block_until_ready(odefunc_reverse(t, y, params))
    assert rev.shape == (batch, n_output)
    assert jnp.allclose(rev, -ref, atol=1e-5, rtol=1e-5)

    print("KERNEL_OK")
</pallas_src>

<mosaic_0001>
module attributes {stable_mosaic.version = 11 : i64} {
  func.func @_odefunc_kernel(%arg0: i32, %arg1: memref<8x4xf32, #tpu.memory_space<vmem>>, %arg2: memref<4x32xf32, #tpu.memory_space<vmem>>, %arg3: memref<1x32xf32, #tpu.memory_space<vmem>>, %arg4: memref<32x4xf32, #tpu.memory_space<vmem>>, %arg5: memref<1x4xf32, #tpu.memory_space<vmem>>, %arg6: memref<8x4xf32, #tpu.memory_space<vmem>>) attributes {dimension_semantics = [#tpu.dimension_semantics<parallel>], iteration_bounds = array<i64: 1>, scalar_prefetch = 0 : i64, scratch_operands = 0 : i64, tpu.core_type = #tpu.core_type<tc>, window_params = [{transform_indices = @transform_0, window_bounds = array<i64: 8, 4>}, {pipeline_mode = #tpu.pipeline_mode<synchronous>, transform_indices = @transform_1, window_bounds = array<i64: 4, 32>}, {pipeline_mode = #tpu.pipeline_mode<synchronous>, transform_indices = @transform_2, window_bounds = array<i64: 1, 32>}, {pipeline_mode = #tpu.pipeline_mode<synchronous>, transform_indices = @transform_3, window_bounds = array<i64: 32, 4>}, {pipeline_mode = #tpu.pipeline_mode<synchronous>, transform_indices = @transform_4, window_bounds = array<i64: 1, 4>}, {transform_indices = @transform_5, window_bounds = array<i64: 8, 4>}]} {
    %c0 = arith.constant 0 : index
    %c0_0 = arith.constant 0 : index
    %0 = vector.load %arg1[%c0, %c0_0] : memref<8x4xf32, #tpu.memory_space<vmem>>, vector<8x4xf32>
    %c0_1 = arith.constant 0 : index
    %c0_2 = arith.constant 0 : index
    %1 = vector.load %arg2[%c0_1, %c0_2] : memref<4x32xf32, #tpu.memory_space<vmem>>, vector<4x32xf32>
    %cst = arith.constant dense<0.000000e+00> : vector<8x32xf32>
    %2 = tpu.matmul %0, %1, %cst {dimension_numbers = #tpu.dot_dimension_numbers<[1], [0], [0], [1], [0, 0, 1, 1], [], []>} : vector<8x4xf32>, vector<4x32xf32>, vector<8x32xf32> -> vector<8x32xf32>
    %c0_3 = arith.constant 0 : index
    %c0_4 = arith.constant 0 : index
    %3 = vector.load %arg3[%c0_3, %c0_4] : memref<1x32xf32, #tpu.memory_space<vmem>>, vector<1x32xf32>
    %4 = vector.broadcast %3 : vector<1x32xf32> to vector<8x32xf32>
    %5 = arith.addf %2, %4 : vector<8x32xf32>
    %6 = math.tanh %5 : vector<8x32xf32>
    %c0_5 = arith.constant 0 : index
    %c0_6 = arith.constant 0 : index
    %7 = vector.load %arg4[%c0_5, %c0_6] : memref<32x4xf32, #tpu.memory_space<vmem>>, vector<32x4xf32>
    %cst_7 = arith.constant dense<0.000000e+00> : vector<8x4xf32>
    %8 = tpu.matmul %6, %7, %cst_7 {dimension_numbers = #tpu.dot_dimension_numbers<[1], [0], [0], [1], [0, 0, 1, 1], [], []>} : vector<8x32xf32>, vector<32x4xf32>, vector<8x4xf32> -> vector<8x4xf32>
    %c0_8 = arith.constant 0 : index
    %c0_9 = arith.constant 0 : index
    %9 = vector.load %arg5[%c0_8, %c0_9] : memref<1x4xf32, #tpu.memory_space<vmem>>, vector<1x4xf32>
    %10 = vector.broadcast %9 : vector<1x4xf32> to vector<8x4xf32>
    %11 = arith.addf %8, %10 : vector<8x4xf32>
    %c0_10 = arith.constant 0 : index
    %c0_11 = arith.constant 0 : index
    %12 = vector.load %arg6[%c0_10, %c0_11] : memref<8x4xf32, #tpu.memory_space<vmem>>, vector<8x4xf32>
    tpu.vector_store %arg6[%c0_10, %c0_11], %11 {strides = array<i32>} : memref<8x4xf32, #tpu.memory_space<vmem>>, vector<8x4xf32>,
    return
  }
  func.func @transform_0(%arg0: i32) -> (i32, i32) {
    %c0_i32 = arith.constant 0 : i32
    %c0_i32_0 = arith.constant 0 : i32
    return %arg0, %c0_i32 : i32, i32
  }
  func.func @transform_1(%arg0: i32) -> (i32, i32) {
    %c0_i32 = arith.constant 0 : i32
    %c0_i32_0 = arith.constant 0 : i32
    %c0_i32_1 = arith.constant 0 : i32
    return %c0_i32, %c0_i32_0 : i32, i32
  }
  func.func @transform_2(%arg0: i32) -> (i32, i32) {
    %c0_i32 = arith.constant 0 : i32
    %c0_i32_0 = arith.constant 0 : i32
    %c0_i32_1 = arith.constant 0 : i32
    return %c0_i32, %c0_i32_0 : i32, i32
  }
  func.func @transform_3(%arg0: i32) -> (i32, i32) {
    %c0_i32 = arith.constant 0 : i32
    %c0_i32_0 = arith.constant 0 : i32
    %c0_i32_1 = arith.constant 0 : i32
    return %c0_i32, %c0_i32_0 : i32, i32
  }
  func.func @transform_4(%arg0: i32) -> (i32, i32) {
    %c0_i32 = arith.constant 0 : i32
    %c0_i32_0 = arith.constant 0 : i32
    %c0_i32_1 = arith.constant 0 : i32
    return %c0_i32, %c0_i32_0 : i32, i32
  }
  func.func @transform_5(%arg0: i32) -> (i32, i32) {
    %c0_i32 = arith.constant 0 : i32
    %c0_i32_0 = arith.constant 0 : i32
    return %arg0, %c0_i32 : i32, i32
  }
}

</mosaic_0001>

<llo_original>
// kernel: tpu_custom_call.1
$region0: #{tpu_custom_call.1}
  #allocation0 [shape = 'u32[]', space=smem, size = 0x4, offset = 0x4, fixed_abs, tag = 'smem constant byte address 0x4 - core index']
  #allocation1 [shape = 'u32[144,128]{1,0:T(1,128)}', space=vmem, size = 0x12000, scoped, tag = 'internal scratch']
  %s0 = inlined_call_operand.vmem [shape: f32[8,4], index: 0, kind: input, shape index: {}]
  %s1 = inlined_call_operand.vmem [shape: f32[4,32], index: 1, kind: input, shape index: {}]
  %s2 = inlined_call_operand.vmem [shape: f32[1,32], index: 2, kind: input, shape index: {}]
  %s3 = inlined_call_operand.vmem [shape: f32[32,4], index: 3, kind: input, shape index: {}]
  %s4 = inlined_call_operand.vmem [shape: f32[1,4], index: 4, kind: input, shape index: {}]
  %s5 = inlined_call_operand.vmem [shape: f32[8,4], index: 5, kind: output, shape index: {}]
  %s6 = sld [smem:[#allocation0]]
  $region30: #{tpu_custom_call.1} parent=0
    _
  %s8 = ssub.s32 1, %s6
  %s9 = scalar_select 0, %s8, %s6
  // Predicated region
  $region2: #{tpu_custom_call.1} parent=0 // pred_check
    _
  $region3: #{tpu_custom_call.1} parent=0 // pred_check_branch
    %11 = sbr.rel (0) target = $region5
  $region4: #{tpu_custom_call.1} parent=0 // pred_region
    _
  $region5: #{tpu_custom_call.1} parent=0 // pred_fallthru
    _
  // Predicated region
  $region6: #{tpu_custom_call.1} parent=0 // pred_check
    _
  $region7: #{tpu_custom_call.1} parent=0 // pred_check_branch
    %13 = sbr.rel (0) target = $region9
  $region8: #{tpu_custom_call.1} parent=0 // pred_region
    _
  $region9: #{tpu_custom_call.1} parent=0 // pred_fallthru
    _
  // Predicated region
  $region10: #{tpu_custom_call.1} parent=0 // pred_check
    _
  $region11: #{tpu_custom_call.1} parent=0 // pred_check_branch
    %15 = sbr.rel (0) target = $region13
  $region12: #{tpu_custom_call.1} parent=0 // pred_region
    _
  $region13: #{tpu_custom_call.1} parent=0 // pred_fallthru
    _
  // Predicated region
  $region14: #{tpu_custom_call.1} parent=0 // pred_check
    _
  $region15: #{tpu_custom_call.1} parent=0 // pred_check_branch
    %17 = sbr.rel (0) target = $region17
  $region16: #{tpu_custom_call.1} parent=0 // pred_region
    _
  $region17: #{tpu_custom_call.1} parent=0 // pred_fallthru
    _
  // Predicated region
  $region18: #{tpu_custom_call.1} parent=0 // pred_check
    _
  $region19: #{tpu_custom_call.1} parent=0 // pred_check_branch
    %19 = sbr.rel (0) target = $region21
  $region20: #{tpu_custom_call.1} parent=0 // pred_region
    _
  $region21: #{tpu_custom_call.1} parent=0 // pred_fallthru
    _
  %v20 = vld [vmem:[%s0] sm:$0xff]
  %v21 = vld [vmem:[%s1] sm:$0xf]
  %v22 = vld [vmem:[%s2] sm:$0x1]
  %v24 = vlaneseq
  %v25 = vshrl.u32 %v24, 7
  %v26 = vsub.s32 0, %v25
  %v27 = vrot.slane %v22, %v26
  %vm29 = vcmask 31744
  %v31 = vsel %vm29, %v20, 0
  %vm33 = vcmask 1043456
  %v35 = vsel %vm33, %v21, 0
  %37 = vmatprep.subr.mxu0 0.0
  %38 = vmatpush1.msra.mxu0 %v35
  %39 = vmatprep.subr.mxu0 0.0
  %40 = vmatpush1.msra.mxu0 0.0
  %41 = vmatprep.subr.mxu0 0.0
  %42 = vmatpush1.msra.mxu0 0.0
  %43 = vmatprep.subr.mxu0 0.0
  %44 = vmatpush1.msra.mxu0 0.0
  %45 = vmatprep.subr.mxu0 0.0
  %46 = vmatpush1.msra.mxu0 0.0
  %47 = vmatprep.subr.mxu0 0.0
  %48 = vmatpush1.msra.mxu0 0.0
  %49 = vmatprep.subr.mxu0 0.0
  %50 = vmatpush1.msra.mxu0 0.0
  %51 = vmatprep.subr.mxu0 0.0
  %52 = vmatpush1.msra.mxu0 0.0
  %53 = vmatprep.subr.mxu0 0.0
  %54 = vmatpush1.msra.mxu0 0.0
  %55 = vmatprep.subr.mxu0 0.0
  %56 = vmatpush1.msra.mxu0 0.0
  %57 = vmatprep.subr.mxu0 0.0
  %58 = vmatpush1.msra.mxu0 0.0
  %59 = vmatprep.subr.mxu0 0.0
  %60 = vmatpush1.msra.mxu0 0.0
  %61 = vmatprep.subr.mxu0 0.0
  %62 = vmatpush1.msra.mxu0 0.0
  %63 = vmatprep.subr.mxu0 0.0
  %64 = vmatpush1.msra.mxu0 0.0
  %65 = vmatprep.subr.mxu0 0.0
  %66 = vmatpush1.msra.mxu0 0.0
  %67 = vmatprep.subr.mxu0 0.0
  %68 = vmatpush1.msra.mxu0 0.0
  %69 = vmatprep.subr.mxu0 0.0
  %70 = vmatpush1.msra.mxu0 0.0
  %71 = vmatprep.subr.mxu0 0.0
  %72 = vmatpush1.msra.mxu0 0.0
  %73 = vmatprep.subr.mxu0 0.0
  %74 = vmatpush1.msra.mxu0 0.0
  %75 = vmatprep.subr.mxu0 0.0
  %76 = vmatpush1.msra.mxu0 0.0
  %77 = vmatprep.subr.mxu0 0.0
  %78 = vmatpush1.msra.mxu0 0.0
  %79 = vmatprep.subr.mxu0 0.0
  %80 = vmatpush1.msra.mxu0 0.0
  %81 = vmatprep.subr.mxu0 0.0
  %82 = vmatpush1.msra.mxu0 0.0
  %83 = vmatprep.subr.mxu0 0.0
  %84 = vmatpush1.msra.mxu0 0.0
  %85 = vmatprep.subr.mxu0 0.0
  %86 = vmatpush1.msra.mxu0 0.0
  %87 = vmatprep.subr.mxu0 0.0
  %88 = vmatpush1.msra.mxu0 0.0
  %89 = vmatprep.subr.mxu0 0.0
  %90 = vmatpush1.msra.mxu0 0.0
  %91 = vmatprep.subr.mxu0 0.0
  %92 = vmatpush1.msra.mxu0 0.0
  %93 = vmatprep.subr.mxu0 0.0
  %94 = vmatpush1.msra.mxu0 0.0
  %95 = vmatprep.subr.mxu0 0.0
  %96 = vmatpush1.msra.mxu0 0.0
  %97 = vmatprep.subr.mxu0 0.0
  %98 = vmatpush1.msra.mxu0 0.0
  %99 = vmatprep.subr.mxu0 0.0
  %100 = vmatpush1.msra.mxu0 0.0
  %101 = vmatprep.mubr.f32.mxu0 0.0
  %102 = vmatmul.mubr.f32.gmra.mrb[0].mxu0 %v31
  %v103 = vpop.f32.mrb[0].mxu0
  %v104 = vadd.f32 %v27, %v103
  %v105 = vpop.f32.mrb[0].mxu0
  %106 = vdwg.mxu0
  %v107 = vtanh.pop %v104
  %v108 = vld [vmem:[%s3] sm:$0xff]
  %v109 = vld [vmem:[%s3 + $0x8] sm:$0xff]
  %v110 = vld [vmem:[%s3 + $0x10] sm:$0xff]
  %v111 = vld [vmem:[%s3 + $0x18] sm:$0xff]
  %v112 = vld [vmem:[%s4] sm:$0x1]
  %v114 = vlaneseq
  %v115 = vshrl.u32 %v114, 7
  %v116 = vsub.s32 0, %v115
  %v117 = vrot.slane %v112, %v116
  %vm119 = vcmask 261120
  %v121 = vsel %vm119, %v107, 0
  %123 = vmatprep.subr.mxu0 0.0
  %124 = vmatpush1.msra.mxu0 %v108
  %125 = vmatprep.subr.mxu0 0.0
  %126 = vmatpush1.msra.mxu0 %v109
  %127 = vmatprep.subr.mxu0 0.0
  %128 = vmatpush1.msra.mxu0 %v110
  %129 = vmatprep.subr.mxu0 0.0
  %130 = vmatpush1.msra.mxu0 %v111
  %131 = vmatprep.subr.mxu0 0.0
  %132 = vmatpush1.msra.mxu0 0.0
  %133 = vmatprep.subr.mxu0 0.0
  %134 = vmatpush1.msra.mxu0 0.0
  %135 = vmatprep.subr.mxu0 0.0
  %136 = vmatpush1.msra.mxu0 0.0
  %137 = vmatprep.subr.mxu0 0.0
  %138 = vmatpush1.msra.mxu0 0.0
  %139 = vmatprep.subr.mxu0 0.0
  %140 = vmatpush1.msra.mxu0 0.0
  %141 = vmatprep.subr.mxu0 0.0
  %142 = vmatpush1.msra.mxu0 0.0
  %143 = vmatprep.subr.mxu0 0.0
  %144 = vmatpush1.msra.mxu0 0.0
  %145 = vmatprep.subr.mxu0 0.0
  %146 = vmatpush1.msra.mxu0 0.0
  %147 = vmatprep.subr.mxu0 0.0
  %148 = vmatpush1.msra.mxu0 0.0
  %149 = vmatprep.subr.mxu0 0.0
  %150 = vmatpush1.msra.mxu0 0.0
  %151 = vmatprep.subr.mxu0 0.0
  %152 = vmatpush1.msra.mxu0 0.0
  %153 = vmatprep.subr.mxu0 0.0
  %154 = vmatpush1.msra.mxu0 0.0
  %155 = vmatprep.subr.mxu0 0.0
  %156 = vmatpush1.msra.mxu0 0.0
  %157 = vmatprep.subr.mxu0 0.0
  %158 = vmatpush1.msra.mxu0 0.0
  %159 = vmatprep.subr.mxu0 0.0
  %160 = vmatpush1.msra.mxu0 0.0
  %161 = vmatprep.subr.mxu0 0.0
  %162 = vmatpush1.msra.mxu0 0.0
  %163 = vmatprep.subr.mxu0 0.0
  %164 = vmatpush1.msra.mxu0 0.0
  %165 = vmatprep.subr.mxu0 0.0
  %166 = vmatpush1.msra.mxu0 0.0
  %167 = vmatprep.subr.mxu0 0.0
  %168 = vmatpush1.msra.mxu0 0.0
  %169 = vmatprep.subr.mxu0 0.0
  %170 = vmatpush1.msra.mxu0 0.0
  %171 = vmatprep.subr.mxu0 0.0
  %172 = vmatpush1.msra.mxu0 0.0
  %173 = vmatprep.subr.mxu0 0.0
  %174 = vmatpush1.msra.mxu0 0.0
  %175 = vmatprep.subr.mxu0 0.0
  %176 = vmatpush1.msra.mxu0 0.0
  %177 = vmatprep.subr.mxu0 0.0
  %178 = vmatpush1.msra.mxu0 0.0
  %179 = vmatprep.subr.mxu0 0.0
  %180 = vmatpush1.msra.mxu0 0.0
  %181 = vmatprep.subr.mxu0 0.0
  %182 = vmatpush1.msra.mxu0 0.0
  %183 = vmatprep.subr.mxu0 0.0
  %184 = vmatpush1.msra.mxu0 0.0
  %185 = vmatprep.subr.mxu0 0.0
  %186 = vmatpush1.msra.mxu0 0.0
  %187 = vmatprep.mubr.f32.mxu0 0.0
  %188 = vmatmul.mubr.f32.gmra.mrb[0].mxu0 %v121
  %v189 = vpop.f32.mrb[0].mxu0
  %v190 = vadd.f32 %v117, %v189
  %v191 = vpop.f32.mrb[0].mxu0
  %192 = vdwg.mxu0
  %193 = vst.msk [vmem:[%s5] sm:$0xff] %vm29, %v190
  // Predicated region
  $region22: #{tpu_custom_call.1} parent=0 // pred_check
    _
  $region23: #{tpu_custom_call.1} parent=0 // pred_check_branch
    %195 = sbr.rel (0) target = $region25
  $region24: #{tpu_custom_call.1} parent=0 // pred_region
    _
  $region25: #{tpu_custom_call.1} parent=0 // pred_fallthru
    _
  // Predicated region
  $region26: #{tpu_custom_call.1} parent=0 // pred_check
    _
  $region27: #{tpu_custom_call.1} parent=0 // pred_check_branch
    %197 = sbr.rel (0) target = $region29
  $region28: #{tpu_custom_call.1} parent=0 // pred_region
    _
  $region29: #{tpu_custom_call.1} parent=0 // pred_fallthru
    _

</llo_original>
